<compile_context>
chip_gen: v6e
topology: v6e:2x2x1
jax: 0.10.0
libtpu: 0.0.40
codegen_flags: <defaults>
</compile_context>

<pallas_src>
import jax
import jax.numpy as jnp
from jax.experimental import pallas as pl
from jax.experimental.pallas import tpu as pltpu


def _make_gated_gcn_kernel(H, C, N, T):
    def kernel(adj_ref, x_ref, o_ref):
        # adj_ref: (H*C*C,) f32 in SMEM  -- whole adjacency, fetched once
        # x_ref:   (1, C, N, T) f32 VMEM -- one batch
        # o_ref:   (1, C, N, H*T) f32 VMEM -- final layout (permute fused)

        # Hoist the C input-channel planes once; reused for every (h, c).
        xs = [x_ref[0, m] for m in range(C)]              # each (N, T)

        for h in range(H):
            rows = []
            for c in range(C):
                base = (h * C + c) * C
                acc = adj_ref[base] * xs[0]                # scalar * (N, T) on VPU
                for m in range(1, C):
                    acc = acc + adj_ref[base + m] * xs[m]
                rows.append(acc)
            # Stack along the leading (major) axis: cheap sublane placement.
            blk = jnp.stack(rows, axis=0)                  # (C, N, T)
            # One tanh (EUP) and one store per head, into the fused lane slice.
            o_ref[0, :, :, h * T:(h + 1) * T] = jnp.tanh(blk)

    return kernel


def gated_gcn_forward(x, adjs):
    """x: (B, C, N, T) f32, adjs: (H, C, C) f32 -> (B, C, N, H*T) f32."""
    B, C, N, T = x.shape
    H = adjs.shape[0]
    x = x.astype(jnp.float32)
    adj_flat = adjs.astype(jnp.float32).reshape(H * C * C)

    kernel = _make_gated_gcn_kernel(H, C, N, T)

    out = pl.pallas_call(
        kernel,
        out_shape=jax.ShapeDtypeStruct((B, C, N, H * T), jnp.float32),
        grid_spec=pltpu.PrefetchScalarGridSpec(
            num_scalar_prefetch=0,
            grid=(B,),
            in_specs=[
                # Tiny adjacency lives in SMEM (48 scalars), loaded exactly once.
                pl.BlockSpec(memory_space=pltpu.MemorySpace.SMEM),
                # One batch of x per step; full (C, N, T) block.
                pl.BlockSpec((1, C, N, T), lambda b: (b, 0, 0, 0)),
            ],
            # Kernel writes the final (B, C, N, H*T) layout directly.
            out_specs=pl.BlockSpec((1, C, N, H * T), lambda b: (b, 0, 0, 0)),
        ),
        compiler_params=pltpu.CompilerParams(
            dimension_semantics=("parallel",)),
    )(adj_flat, x)
    return out


def gated_gcn_reference(x, adjs):
    B, C, N, T = x.shape
    h = jnp.einsum('HNM,BMIS->BHNIS', adjs, x)
    h = jnp.transpose(h, (0, 2, 3, 1, 4)).reshape(B, C, N, -1)
    return jnp.tanh(h)


if __name__ == "__main__":
    # Small shapes consistent with the module: B=2 batches, C=4 channels,
    # N=16 nodes, T=16 seq_len, heads=3.
    B, C, N, T, H = 2, 4, 16, 16, 3
    key = jax.random.PRNGKey(0)
    kx, ka, kw, kb = jax.random.split(key, 4)

    x = jax.random.normal(kx, (B, C, N, T), dtype=jnp.float32)
    adjs = jax.random.normal(ka, (H, C, C), dtype=jnp.float32)

    # Parameters from __init__ (nn.Linear(heads*seq_len, seq_len), Dropout):
    # deterministically initialized here but UNUSED by the PyTorch forward.
    fc_weight = jax.random.normal(kw, (T, H * T), dtype=jnp.float32) * 0.02
    fc_bias = jax.random.normal(kb, (T,), dtype=jnp.float32) * 0.02
    # TODO(synk): fc and dropout are never applied in the reference forward,
    # so they are intentionally not part of the kernel.

    out = jax.block_until_ready(gated_gcn_forward(x, adjs))

    ref = gated_gcn_reference(x, adjs)
    assert out.shape == (B, C, N, H * T)
    assert jnp.allclose(out, ref, atol=1e-5, rtol=1e-5)
    print("KERNEL_OK")
</pallas_src>

<mosaic_0001>
module attributes {stable_mosaic.version = 11 : i64} {
  func.func @kernel(%arg0: i32, %arg1: memref<48xf32, #tpu.memory_space<smem>>, %arg2: memref<1x4x16x16xf32, #tpu.memory_space<vmem>>, %arg3: memref<1x4x16x48xf32, #tpu.memory_space<vmem>>) attributes {dimension_semantics = [#tpu.dimension_semantics<parallel>], iteration_bounds = array<i64: 2>, scalar_prefetch = 0 : i64, scratch_operands = 0 : i64, tpu.core_type = #tpu.core_type<tc>, window_params = [{transform_indices = @transform_0, window_bounds = array<i64: 48>}, {transform_indices = @transform_1, window_bounds = array<i64: 1, 4, 16, 16>}, {transform_indices = @transform_2, window_bounds = array<i64: 1, 4, 16, 48>}]} {
    %c0 = arith.constant 0 : index
    %c0_0 = arith.constant 0 : index
    %c0_1 = arith.constant 0 : index
    %c0_2 = arith.constant 0 : index
    %0 = vector.load %arg2[%c0, %c0_0, %c0_1, %c0_2] : memref<1x4x16x16xf32, #tpu.memory_space<vmem>>, vector<1x1x16x16xf32>
    %1 = vector.shape_cast %0 : vector<1x1x16x16xf32> to vector<16x16xf32>
    %c0_3 = arith.constant 0 : index
    %c1 = arith.constant 1 : index
    %c0_4 = arith.constant 0 : index
    %c0_5 = arith.constant 0 : index
    %2 = vector.load %arg2[%c0_3, %c1, %c0_4, %c0_5] : memref<1x4x16x16xf32, #tpu.memory_space<vmem>>, vector<1x1x16x16xf32>
    %3 = vector.shape_cast %2 : vector<1x1x16x16xf32> to vector<16x16xf32>
    %c0_6 = arith.constant 0 : index
    %c2 = arith.constant 2 : index
    %c0_7 = arith.constant 0 : index
    %c0_8 = arith.constant 0 : index
    %4 = vector.load %arg2[%c0_6, %c2, %c0_7, %c0_8] : memref<1x4x16x16xf32, #tpu.memory_space<vmem>>, vector<1x1x16x16xf32>
    %5 = vector.shape_cast %4 : vector<1x1x16x16xf32> to vector<16x16xf32>
    %c0_9 = arith.constant 0 : index
    %c3 = arith.constant 3 : index
    %c0_10 = arith.constant 0 : index
    %c0_11 = arith.constant 0 : index
    %6 = vector.load %arg2[%c0_9, %c3, %c0_10, %c0_11] : memref<1x4x16x16xf32, #tpu.memory_space<vmem>>, vector<1x1x16x16xf32>
    %7 = vector.shape_cast %6 : vector<1x1x16x16xf32> to vector<16x16xf32>
    %c0_12 = arith.constant 0 : index
    %8 = memref.load %arg1[%c0_12] : memref<48xf32, #tpu.memory_space<smem>>
    %9 = vector.broadcast %8 : f32 to vector<16x16xf32>
    %10 = arith.mulf %9, %1 : vector<16x16xf32>
    %c1_13 = arith.constant 1 : index
    %11 = memref.load %arg1[%c1_13] : memref<48xf32, #tpu.memory_space<smem>>
    %12 = vector.broadcast %11 : f32 to vector<16x16xf32>
    %13 = arith.mulf %12, %3 : vector<16x16xf32>
    %14 = arith.addf %10, %13 : vector<16x16xf32>
    %c2_14 = arith.constant 2 : index
    %15 = memref.load %arg1[%c2_14] : memref<48xf32, #tpu.memory_space<smem>>
    %16 = vector.broadcast %15 : f32 to vector<16x16xf32>
    %17 = arith.mulf %16, %5 : vector<16x16xf32>
    %18 = arith.addf %14, %17 : vector<16x16xf32>
    %c3_15 = arith.constant 3 : index
    %19 = memref.load %arg1[%c3_15] : memref<48xf32, #tpu.memory_space<smem>>
    %20 = vector.broadcast %19 : f32 to vector<16x16xf32>
    %21 = arith.mulf %20, %7 : vector<16x16xf32>
    %22 = arith.addf %18, %21 : vector<16x16xf32>
    %c4 = arith.constant 4 : index
    %23 = memref.load %arg1[%c4] : memref<48xf32, #tpu.memory_space<smem>>
    %24 = vector.broadcast %23 : f32 to vector<16x16xf32>
    %25 = arith.mulf %24, %1 : vector<16x16xf32>
    %c5 = arith.constant 5 : index
    %26 = memref.load %arg1[%c5] : memref<48xf32, #tpu.memory_space<smem>>
    %27 = vector.broadcast %26 : f32 to vector<16x16xf32>
    %28 = arith.mulf %27, %3 : vector<16x16xf32>
    %29 = arith.addf %25, %28 : vector<16x16xf32>
    %c6 = arith.constant 6 : index
    %30 = memref.load %arg1[%c6] : memref<48xf32, #tpu.memory_space<smem>>
    %31 = vector.broadcast %30 : f32 to vector<16x16xf32>
    %32 = arith.mulf %31, %5 : vector<16x16xf32>
    %33 = arith.addf %29, %32 : vector<16x16xf32>
    %c7 = arith.constant 7 : index
    %34 = memref.load %arg1[%c7] : memref<48xf32, #tpu.memory_space<smem>>
    %35 = vector.broadcast %34 : f32 to vector<16x16xf32>
    %36 = arith.mulf %35, %7 : vector<16x16xf32>
    %37 = arith.addf %33, %36 : vector<16x16xf32>
    %c8 = arith.constant 8 : index
    %38 = memref.load %arg1[%c8] : memref<48xf32, #tpu.memory_space<smem>>
    %39 = vector.broadcast %38 : f32 to vector<16x16xf32>
    %40 = arith.mulf %39, %1 : vector<16x16xf32>
    %c9 = arith.constant 9 : index
    %41 = memref.load %arg1[%c9] : memref<48xf32, #tpu.memory_space<smem>>
    %42 = vector.broadcast %41 : f32 to vector<16x16xf32>
    %43 = arith.mulf %42, %3 : vector<16x16xf32>
    %44 = arith.addf %40, %43 : vector<16x16xf32>
    %c10 = arith.constant 10 : index
    %45 = memref.load %arg1[%c10] : memref<48xf32, #tpu.memory_space<smem>>
    %46 = vector.broadcast %45 : f32 to vector<16x16xf32>
    %47 = arith.mulf %46, %5 : vector<16x16xf32>
    %48 = arith.addf %44, %47 : vector<16x16xf32>
    %c11 = arith.constant 11 : index
    %49 = memref.load %arg1[%c11] : memref<48xf32, #tpu.memory_space<smem>>
    %50 = vector.broadcast %49 : f32 to vector<16x16xf32>
    %51 = arith.mulf %50, %7 : vector<16x16xf32>
    %52 = arith.addf %48, %51 : vector<16x16xf32>
    %c12 = arith.constant 12 : index
    %53 = memref.load %arg1[%c12] : memref<48xf32, #tpu.memory_space<smem>>
    %54 = vector.broadcast %53 : f32 to vector<16x16xf32>
    %55 = arith.mulf %54, %1 : vector<16x16xf32>
    %c13 = arith.constant 13 : index
    %56 = memref.load %arg1[%c13] : memref<48xf32, #tpu.memory_space<smem>>
    %57 = vector.broadcast %56 : f32 to vector<16x16xf32>
    %58 = arith.mulf %57, %3 : vector<16x16xf32>
    %59 = arith.addf %55, %58 : vector<16x16xf32>
    %c14 = arith.constant 14 : index
    %60 = memref.load %arg1[%c14] : memref<48xf32, #tpu.memory_space<smem>>
    %61 = vector.broadcast %60 : f32 to vector<16x16xf32>
    %62 = arith.mulf %61, %5 : vector<16x16xf32>
    %63 = arith.addf %59, %62 : vector<16x16xf32>
    %c15 = arith.constant 15 : index
    %64 = memref.load %arg1[%c15] : memref<48xf32, #tpu.memory_space<smem>>
    %65 = vector.broadcast %64 : f32 to vector<16x16xf32>
    %66 = arith.mulf %65, %7 : vector<16x16xf32>
    %67 = arith.addf %63, %66 : vector<16x16xf32>
    %68 = vector.shape_cast %22 : vector<16x16xf32> to vector<1x16x16xf32>
    %69 = vector.shape_cast %37 : vector<16x16xf32> to vector<1x16x16xf32>
    %70 = vector.shape_cast %52 : vector<16x16xf32> to vector<1x16x16xf32>
    %71 = vector.shape_cast %67 : vector<16x16xf32> to vector<1x16x16xf32>
    %72 = tpu.concatenate %68, %69, %70, %71 in 0 : vector<1x16x16xf32>, vector<1x16x16xf32>, vector<1x16x16xf32>, vector<1x16x16xf32> -> vector<4x16x16xf32>
    %73 = math.tanh %72 : vector<4x16x16xf32>
    %c0_16 = arith.constant 0 : index
    %c0_17 = arith.constant 0 : index
    %c0_18 = arith.constant 0 : index
    %c0_19 = arith.constant 0 : index
    %74 = vector.load %arg3[%c0_16, %c0_17, %c0_18, %c0_19] : memref<1x4x16x48xf32, #tpu.memory_space<vmem>>, vector<1x4x16x16xf32>
    %75 = vector.shape_cast %74 : vector<1x4x16x16xf32> to vector<4x16x16xf32>
    %76 = vector.shape_cast %73 : vector<4x16x16xf32> to vector<1x4x16x16xf32>
    tpu.vector_store %arg3[%c0_16, %c0_17, %c0_18, %c0_19], %76 {strides = array<i32>} : memref<1x4x16x48xf32, #tpu.memory_space<vmem>>, vector<1x4x16x16xf32>,
    %c16 = arith.constant 16 : index
    %77 = memref.load %arg1[%c16] : memref<48xf32, #tpu.memory_space<smem>>
    %78 = vector.broadcast %77 : f32 to vector<16x16xf32>
    %79 = arith.mulf %78, %1 : vector<16x16xf32>
    %c17 = arith.constant 17 : index
    %80 = memref.load %arg1[%c17] : memref<48xf32, #tpu.memory_space<smem>>
    %81 = vector.broadcast %80 : f32 to vector<16x16xf32>
    %82 = arith.mulf %81, %3 : vector<16x16xf32>
    %83 = arith.addf %79, %82 : vector<16x16xf32>
    %c18 = arith.constant 18 : index
    %84 = memref.load %arg1[%c18] : memref<48xf32, #tpu.memory_space<smem>>
    %85 = vector.broadcast %84 : f32 to vector<16x16xf32>
    %86 = arith.mulf %85, %5 : vector<16x16xf32>
    %87 = arith.addf %83, %86 : vector<16x16xf32>
    %c19 = arith.constant 19 : index
    %88 = memref.load %arg1[%c19] : memref<48xf32, #tpu.memory_space<smem>>
    %89 = vector.broadcast %88 : f32 to vector<16x16xf32>
    %90 = arith.mulf %89, %7 : vector<16x16xf32>
    %91 = arith.addf %87, %90 : vector<16x16xf32>
    %c20 = arith.constant 20 : index
    %92 = memref.load %arg1[%c20] : memref<48xf32, #tpu.memory_space<smem>>
    %93 = vector.broadcast %92 : f32 to vector<16x16xf32>
    %94 = arith.mulf %93, %1 : vector<16x16xf32>
    %c21 = arith.constant 21 : index
    %95 = memref.load %arg1[%c21] : memref<48xf32, #tpu.memory_space<smem>>
    %96 = vector.broadcast %95 : f32 to vector<16x16xf32>
    %97 = arith.mulf %96, %3 : vector<16x16xf32>
    %98 = arith.addf %94, %97 : vector<16x16xf32>
    %c22 = arith.constant 22 : index
    %99 = memref.load %arg1[%c22] : memref<48xf32, #tpu.memory_space<smem>>
    %100 = vector.broadcast %99 : f32 to vector<16x16xf32>
    %101 = arith.mulf %100, %5 : vector<16x16xf32>
    %102 = arith.addf %98, %101 : vector<16x16xf32>
    %c23 = arith.constant 23 : index
    %103 = memref.load %arg1[%c23] : memref<48xf32, #tpu.memory_space<smem>>
    %104 = vector.broadcast %103 : f32 to vector<16x16xf32>
    %105 = arith.mulf %104, %7 : vector<16x16xf32>
    %106 = arith.addf %102, %105 : vector<16x16xf32>
    %c24 = arith.constant 24 : index
    %107 = memref.load %arg1[%c24] : memref<48xf32, #tpu.memory_space<smem>>
    %108 = vector.broadcast %107 : f32 to vector<16x16xf32>
    %109 = arith.mulf %108, %1 : vector<16x16xf32>
    %c25 = arith.constant 25 : index
    %110 = memref.load %arg1[%c25] : memref<48xf32, #tpu.memory_space<smem>>
    %111 = vector.broadcast %110 : f32 to vector<16x16xf32>
    %112 = arith.mulf %111, %3 : vector<16x16xf32>
    %113 = arith.addf %109, %112 : vector<16x16xf32>
    %c26 = arith.constant 26 : index
    %114 = memref.load %arg1[%c26] : memref<48xf32, #tpu.memory_space<smem>>
    %115 = vector.broadcast %114 : f32 to vector<16x16xf32>
    %116 = arith.mulf %115, %5 : vector<16x16xf32>
    %117 = arith.addf %113, %116 : vector<16x16xf32>
    %c27 = arith.constant 27 : index
    %118 = memref.load %arg1[%c27] : memref<48xf32, #tpu.memory_space<smem>>
    %119 = vector.broadcast %118 : f32 to vector<16x16xf32>
    %120 = arith.mulf %119, %7 : vector<16x16xf32>
    %121 = arith.addf %117, %120 : vector<16x16xf32>
    %c28 = arith.constant 28 : index
    %122 = memref.load %arg1[%c28] : memref<48xf32, #tpu.memory_space<smem>>
    %123 = vector.broadcast %122 : f32 to vector<16x16xf32>
    %124 = arith.mulf %123, %1 : vector<16x16xf32>
    %c29 = arith.constant 29 : index
    %125 = memref.load %arg1[%c29] : memref<48xf32, #tpu.memory_space<smem>>
    %126 = vector.broadcast %125 : f32 to vector<16x16xf32>
    %127 = arith.mulf %126, %3 : vector<16x16xf32>
    %128 = arith.addf %124, %127 : vector<16x16xf32>
    %c30 = arith.constant 30 : index
    %129 = memref.load %arg1[%c30] : memref<48xf32, #tpu.memory_space<smem>>
    %130 = vector.broadcast %129 : f32 to vector<16x16xf32>
    %131 = arith.mulf %130, %5 : vector<16x16xf32>
    %132 = arith.addf %128, %131 : vector<16x16xf32>
    %c31 = arith.constant 31 : index
    %133 = memref.load %arg1[%c31] : memref<48xf32, #tpu.memory_space<smem>>
    %134 = vector.broadcast %133 : f32 to vector<16x16xf32>
    %135 = arith.mulf %134, %7 : vector<16x16xf32>
    %136 = arith.addf %132, %135 : vector<16x16xf32>
    %137 = vector.shape_cast %91 : vector<16x16xf32> to vector<1x16x16xf32>
    %138 = vector.shape_cast %106 : vector<16x16xf32> to vector<1x16x16xf32>
    %139 = vector.shape_cast %121 : vector<16x16xf32> to vector<1x16x16xf32>
    %140 = vector.shape_cast %136 : vector<16x16xf32> to vector<1x16x16xf32>
    %141 = tpu.concatenate %137, %138, %139, %140 in 0 : vector<1x16x16xf32>, vector<1x16x16xf32>, vector<1x16x16xf32>, vector<1x16x16xf32> -> vector<4x16x16xf32>
    %142 = math.tanh %141 : vector<4x16x16xf32>
    %c0_20 = arith.constant 0 : index
    %c0_21 = arith.constant 0 : index
    %c0_22 = arith.constant 0 : index
    %c16_23 = arith.constant 16 : index
    %143 = vector.load %arg3[%c0_20, %c0_21, %c0_22, %c16_23] : memref<1x4x16x48xf32, #tpu.memory_space<vmem>>, vector<1x4x16x16xf32>
    %144 = vector.shape_cast %143 : vector<1x4x16x16xf32> to vector<4x16x16xf32>
    %145 = vector.shape_cast %142 : vector<4x16x16xf32> to vector<1x4x16x16xf32>
    tpu.vector_store %arg3[%c0_20, %c0_21, %c0_22, %c16_23], %145 {strides = array<i32>} : memref<1x4x16x48xf32, #tpu.memory_space<vmem>>, vector<1x4x16x16xf32>,
    %c32 = arith.constant 32 : index
    %146 = memref.load %arg1[%c32] : memref<48xf32, #tpu.memory_space<smem>>
    %147 = vector.broadcast %146 : f32 to vector<16x16xf32>
    %148 = arith.mulf %147, %1 : vector<16x16xf32>
    %c33 = arith.constant 33 : index
    %149 = memref.load %arg1[%c33] : memref<48xf32, #tpu.memory_space<smem>>
    %150 = vector.broadcast %149 : f32 to vector<16x16xf32>
    %151 = arith.mulf %150, %3 : vector<16x16xf32>
    %152 = arith.addf %148, %151 : vector<16x16xf32>
    %c34 = arith.constant 34 : index
    %153 = memref.load %arg1[%c34] : memref<48xf32, #tpu.memory_space<smem>>
    %154 = vector.broadcast %153 : f32 to vector<16x16xf32>
    %155 = arith.mulf %154, %5 : vector<16x16xf32>
    %156 = arith.addf %152, %155 : vector<16x16xf32>
    %c35 = arith.constant 35 : index
    %157 = memref.load %arg1[%c35] : memref<48xf32, #tpu.memory_space<smem>>
    %158 = vector.broadcast %157 : f32 to vector<16x16xf32>
    %159 = arith.mulf %158, %7 : vector<16x16xf32>
    %160 = arith.addf %156, %159 : vector<16x16xf32>
    %c36 = arith.constant 36 : index
    %161 = memref.load %arg1[%c36] : memref<48xf32, #tpu.memory_space<smem>>
    %162 = vector.broadcast %161 : f32 to vector<16x16xf32>
    %163 = arith.mulf %162, %1 : vector<16x16xf32>
    %c37 = arith.constant 37 : index
    %164 = memref.load %arg1[%c37] : memref<48xf32, #tpu.memory_space<smem>>
    %165 = vector.broadcast %164 : f32 to vector<16x16xf32>
    %166 = arith.mulf %165, %3 : vector<16x16xf32>
    %167 = arith.addf %163, %166 : vector<16x16xf32>
    %c38 = arith.constant 38 : index
    %168 = memref.load %arg1[%c38] : memref<48xf32, #tpu.memory_space<smem>>
    %169 = vector.broadcast %168 : f32 to vector<16x16xf32>
    %170 = arith.mulf %169, %5 : vector<16x16xf32>
    %171 = arith.addf %167, %170 : vector<16x16xf32>
    %c39 = arith.constant 39 : index
    %172 = memref.load %arg1[%c39] : memref<48xf32, #tpu.memory_space<smem>>
    %173 = vector.broadcast %172 : f32 to vector<16x16xf32>
    %174 = arith.mulf %173, %7 : vector<16x16xf32>
    %175 = arith.addf %171, %174 : vector<16x16xf32>
    %c40 = arith.constant 40 : index
    %176 = memref.load %arg1[%c40] : memref<48xf32, #tpu.memory_space<smem>>
    %177 = vector.broadcast %176 : f32 to vector<16x16xf32>
    %178 = arith.mulf %177, %1 : vector<16x16xf32>
    %c41 = arith.constant 41 : index
    %179 = memref.load %arg1[%c41] : memref<48xf32, #tpu.memory_space<smem>>
    %180 = vector.broadcast %179 : f32 to vector<16x16xf32>
    %181 = arith.mulf %180, %3 : vector<16x16xf32>
    %182 = arith.addf %178, %181 : vector<16x16xf32>
    %c42 = arith.constant 42 : index
    %183 = memref.load %arg1[%c42] : memref<48xf32, #tpu.memory_space<smem>>
    %184 = vector.broadcast %183 : f32 to vector<16x16xf32>
    %185 = arith.mulf %184, %5 : vector<16x16xf32>
    %186 = arith.addf %182, %185 : vector<16x16xf32>
    %c43 = arith.constant 43 : index
    %187 = memref.load %arg1[%c43] : memref<48xf32, #tpu.memory_space<smem>>
    %188 = vector.broadcast %187 : f32 to vector<16x16xf32>
    %189 = arith.mulf %188, %7 : vector<16x16xf32>
    %190 = arith.addf %186, %189 : vector<16x16xf32>
    %c44 = arith.constant 44 : index
    %191 = memref.load %arg1[%c44] : memref<48xf32, #tpu.memory_space<smem>>
    %192 = vector.broadcast %191 : f32 to vector<16x16xf32>
    %193 = arith.mulf %192, %1 : vector<16x16xf32>
    %c45 = arith.constant 45 : index
    %194 = memref.load %arg1[%c45] : memref<48xf32, #tpu.memory_space<smem>>
    %195 = vector.broadcast %194 : f32 to vector<16x16xf32>
    %196 = arith.mulf %195, %3 : vector<16x16xf32>
    %197 = arith.addf %193, %196 : vector<16x16xf32>
    %c46 = arith.constant 46 : index
    %198 = memref.load %arg1[%c46] : memref<48xf32, #tpu.memory_space<smem>>
    %199 = vector.broadcast %198 : f32 to vector<16x16xf32>
    %200 = arith.mulf %199, %5 : vector<16x16xf32>
    %201 = arith.addf %197, %200 : vector<16x16xf32>
    %c47 = arith.constant 47 : index
    %202 = memref.load %arg1[%c47] : memref<48xf32, #tpu.memory_space<smem>>
    %203 = vector.broadcast %202 : f32 to vector<16x16xf32>
    %204 = arith.mulf %203, %7 : vector<16x16xf32>
    %205 = arith.addf %201, %204 : vector<16x16xf32>
    %206 = vector.shape_cast %160 : vector<16x16xf32> to vector<1x16x16xf32>
    %207 = vector.shape_cast %175 : vector<16x16xf32> to vector<1x16x16xf32>
    %208 = vector.shape_cast %190 : vector<16x16xf32> to vector<1x16x16xf32>
    %209 = vector.shape_cast %205 : vector<16x16xf32> to vector<1x16x16xf32>
    %210 = tpu.concatenate %206, %207, %208, %209 in 0 : vector<1x16x16xf32>, vector<1x16x16xf32>, vector<1x16x16xf32>, vector<1x16x16xf32> -> vector<4x16x16xf32>
    %211 = math.tanh %210 : vector<4x16x16xf32>
    %c0_24 = arith.constant 0 : index
    %c0_25 = arith.constant 0 : index
    %c0_26 = arith.constant 0 : index
    %c32_27 = arith.constant 32 : index
    %212 = vector.load %arg3[%c0_24, %c0_25, %c0_26, %c32_27] : memref<1x4x16x48xf32, #tpu.memory_space<vmem>>, vector<1x4x16x16xf32>
    %213 = vector.shape_cast %212 : vector<1x4x16x16xf32> to vector<4x16x16xf32>
    %214 = vector.shape_cast %211 : vector<4x16x16xf32> to vector<1x4x16x16xf32>
    tpu.vector_store %arg3[%c0_24, %c0_25, %c0_26, %c32_27], %214 {strides = array<i32>} : memref<1x4x16x48xf32, #tpu.memory_space<vmem>>, vector<1x4x16x16xf32>,
    return
  }
  func.func @transform_0(%arg0: i32) -> i32 {
    %c0_i32 = arith.constant 0 : i32
    %c0_i32_0 = arith.constant 0 : i32
    return %c0_i32 : i32
  }
  func.func @transform_1(%arg0: i32) -> (i32, i32, i32, i32) {
    %c0_i32 = arith.constant 0 : i32
    %c0_i32_0 = arith.constant 0 : i32
    %c0_i32_1 = arith.constant 0 : i32
    %c0_i32_2 = arith.constant 0 : i32
    return %arg0, %c0_i32, %c0_i32_0, %c0_i32_1 : i32, i32, i32, i32
  }
  func.func @transform_2(%arg0: i32) -> (i32, i32, i32, i32) {
    %c0_i32 = arith.constant 0 : i32
    %c0_i32_0 = arith.constant 0 : i32
    %c0_i32_1 = arith.constant 0 : i32
    %c0_i32_2 = arith.constant 0 : i32
    return %arg0, %c0_i32, %c0_i32_0, %c0_i32_1 : i32, i32, i32, i32
  }
}

</mosaic_0001>

<llo_original>
// kernel: tpu_custom_call.1
$region0: #{tpu_custom_call.1}
  #allocation0 [shape = 'u32[]', space=smem, size = 0x4, offset = 0x4, fixed_abs, tag = 'smem constant byte address 0x4 - core index']
  #allocation1 [shape = 'u32[144,128]{1,0:T(1,128)}', space=vmem, size = 0x12000, scoped, tag = 'internal scratch']
  %s0 = inlined_call_operand.hbm [shape: f32[48], index: 0, kind: input, shape index: {}]
  %s1 = inlined_call_operand.hbm [shape: f32[2,4,16,16], index: 1, kind: input, shape index: {}]
  %s2 = inlined_call_operand.hbm [shape: f32[2,4,16,48], index: 2, kind: output, shape index: {}]
  %s3 = sld [smem:[#allocation0]]
  $region49: #{tpu_custom_call.1} parent=0
    _
  %s5 = ssub.s32 1, %s3
  %s6 = scalar_select 0, %s5, %s3
  $region1: #{tpu_custom_call.1} parent=0
    #allocation2 [shape = 'u8[512]{0}', space=smem, size = 0x200, scoped, tag = 'input window, operand 0, single buffered']
    #allocation3 [shape = 's32[2]{0}', space=sflag, size = 0x8, scoped, tag = 'scoped memory for tpu_custom_call.1']
    #allocation4 [shape = 's32[2]{0}', space=sflag, size = 0x8, scoped, tag = 'scoped memory for tpu_custom_call.1']
    #allocation5 [shape = 's32[2]{0}', space=sflag, size = 0x8, scoped, tag = 'scoped memory for tpu_custom_call.1']
    #allocation6 [shape = 'u8[65536]{0}', space=vmem, size = 0x10000, scoped, tag = 'input window, operand 1']
    #allocation7 [shape = 'u8[65536]{0}', space=vmem, size = 0x10000, scoped, tag = 'output window, operand 0']
    %7 = vsyncpa [#allocation5], 0
    %8 = vsyncpa [#allocation3], 0
    %s9 = scalar_lea.sflag [#allocation3], 1
    %10 = vsyncpa %s9, 0
    %11 = vsyncpa [#allocation4], 0
    %s12 = scalar_lea.sflag [#allocation4], 1
    %13 = vsyncpa %s12, 0
    loop: start=0, step=1, limit=4
    $region2: #{tpu_custom_call.1} parent=1 // loop_pre_header
      _
    $region3: #{tpu_custom_call.1} parent=1 // loop_header
      %s15 = sphi 0, %s19
      %p16 = scmp.ge.s32.totalorder %s15, 4
      %s23 = sphi 0, %s23
      %s25 = sphi 0, %s23
      %s26 = sphi 0, %s25
      %s40 = sphi 0, %s26
      %s46 = sphi 0, %s48
      %s49 = sphi 0, %s46
      %s50 = sphi 0, %s49
      %s66 = sphi 0, %s50
      %s72 = sphi 0, %s74
      %s75 = sphi 0, %s72
      %s76 = sphi 0, %s75
      %s92 = sphi 0, %s76
    $region4: #{tpu_custom_call.1} parent=1 // loop_header_branch
      %18 = sbr.rel (%p16) target = $region8
    $region5: #{tpu_custom_call.1} parent=1 // loop_body
      %s20 = ssub.s32 %s15, 1
      %s21 = ssub.s32 %s15, 2
      %s22 = sadd.s32 %s15, 1
      %s24 = sadd.s32 %s23, 1
      %p27 = scmp.eq.s32.totalorder %s15, 1
      %p28 = scmp.ne.s32.totalorder %s23, %s25
      %p29 = scmp.eq.s32.totalorder %s15, 0
      %p30 = por %p28, %p29
      %p31 = scmp.ne.s32.totalorder %s23, %s25
      %p32 = scmp.eq.s32.totalorder %s20, 1
      %p33 = por %p31, %p32
      %p34 = scmp.ne.s32.totalorder %s25, %s26
      %p35 = scmp.eq.s32.totalorder %s20, 0
      %p36 = por %p34, %p35
      %p37 = scmp.ne.s32.totalorder %s25, %s26
      %p38 = scmp.eq.s32.totalorder %s21, 1
      %p39 = por %p37, %p38
      %p41 = scmp.ne.s32.totalorder %s26, %s40
      %p42 = scmp.eq.s32.totalorder %s21, 0
      %p43 = por %p41, %p42
      %s44 = ssub.s32 %s15, %s22
      %p45 = scmp.eq.s32.totalorder %s44, 0
      %s47 = sadd.s32 %s46, 1
      %s48 = scalar_select %p45, %s46, %s47
      %p51 = pneg %p45
      %p52 = scmp.eq.s32.totalorder %s15, 1
      %p53 = por %p51, %p52
      %p54 = scmp.ne.s32.totalorder %s46, %s49
      %p55 = scmp.eq.s32.totalorder %s15, 0
      %p56 = por %p54, %p55
      %p57 = scmp.ne.s32.totalorder %s46, %s49
      %p58 = scmp.eq.s32.totalorder %s20, 1
      %p59 = por %p57, %p58
      %p60 = scmp.ne.s32.totalorder %s49, %s50
      %p61 = scmp.eq.s32.totalorder %s20, 0
      %p62 = por %p60, %p61
      %p63 = scmp.ne.s32.totalorder %s49, %s50
      %p64 = scmp.eq.s32.totalorder %s21, 1
      %p65 = por %p63, %p64
      %p67 = scmp.ne.s32.totalorder %s50, %s66
      %p68 = scmp.eq.s32.totalorder %s21, 0
      %p69 = por %p67, %p68
      %s70 = ssub.s32 %s15, %s22
      %p71 = scmp.eq.s32.totalorder %s70, 0
      %s73 = sadd.s32 %s72, 1
      %s74 = scalar_select %p71, %s72, %s73
      %p77 = pneg %p71
      %p78 = scmp.eq.s32.totalorder %s15, 1
      %p79 = por %p77, %p78
      %p80 = scmp.ne.s32.totalorder %s72, %s75
      %p81 = scmp.eq.s32.totalorder %s15, 0
      %p82 = por %p80, %p81
      %p83 = scmp.ne.s32.totalorder %s72, %s75
      %p84 = scmp.eq.s32.totalorder %s20, 1
      %p85 = por %p83, %p84
      %p86 = scmp.ne.s32.totalorder %s75, %s76
      %p87 = scmp.eq.s32.totalorder %s20, 0
      %p88 = por %p86, %p87
      %p89 = scmp.ne.s32.totalorder %s75, %s76
      %p90 = scmp.eq.s32.totalorder %s21, 1
      %p91 = por %p89, %p90
      %p93 = scmp.ne.s32.totalorder %s76, %s92
      %p94 = scmp.eq.s32.totalorder %s21, 0
      %p95 = por %p93, %p94
      %p96 = scmp.le.s32.totalorder 1, %s15
      %p97 = scmp.lt.s32.totalorder %s15, 3
      %p98 = pnand %p96, %p97
      %p99 = pneg %p98
      // Predicated region
      $region9: #{tpu_custom_call.1} parent=5 // pred_check
        _
      $region10: #{tpu_custom_call.1} parent=5 // pred_check_branch
        %101 = sbr.rel (%p98) target = $region12
      $region11: #{tpu_custom_call.1} parent=5 // pred_region
        %s102 = ssub.s32 %s15, 1
        // Predicated region
        $region13: #{tpu_custom_call.1} parent=11 // pred_check
          %p103 = pneg %p36
        $region14: #{tpu_custom_call.1} parent=11 // pred_check_branch
          %105 = sbr.rel (%p103) target = $region16
        $region15: #{tpu_custom_call.1} parent=11 // pred_region
          %s107 = ssub.s32 16, 16
          %108 = vsyncadd [#allocation5], %s107
          %111 = dma.hbm_to_smem %s0, 16, [#allocation2], [#allocation5]
        $region16: #{tpu_custom_call.1} parent=11 // pred_fallthru
          _
      $region12: #{tpu_custom_call.1} parent=5 // pred_fallthru
        _
      %p112 = scmp.lt.s32.totalorder %s15, 2
      // Predicated region
      $region17: #{tpu_custom_call.1} parent=5 // pred_check
        %p113 = pneg %p112
      $region18: #{tpu_custom_call.1} parent=5 // pred_check_branch
        %115 = sbr.rel (%p113) target = $region20
      $region19: #{tpu_custom_call.1} parent=5 // pred_region
        // Predicated region
        $region21: #{tpu_custom_call.1} parent=19 // pred_check
          %p116 = pneg %p56
        $region22: #{tpu_custom_call.1} parent=19 // pred_check_branch
          %118 = sbr.rel (%p116) target = $region24
        $region23: #{tpu_custom_call.1} parent=19 // pred_region
          %s119 = sand.u32 %s46, 1
          %s120 = scalar_lea.sflag [#allocation3], %s119
          %s121 = sand.u32 %s46, 1
          %s122 = smul.addr %s121, 64
          %s123 = scalar_lea.vmem [#allocation6], %s122
          %s125 = ssub.s32 1024, 1024
          %126 = vsyncadd %s120, %s125
          %s127 = smul.addr %s15, 8
          %s128 = smul.addr %s127, 128
          %s129 = scalar_lea.hbm %s1, %s128
          %s130 = sshll.u32 %s123, 4
          %s131 = int_to_ptr.vmem [resolvable:$true] %s130
          %136 = dma.hbm_to_vmem [thread:$0]  %s129, 1024, %s131, %s120, 128, 128, 8
        $region24: #{tpu_custom_call.1} parent=19 // pred_fallthru
          _
      $region20: #{tpu_custom_call.1} parent=5 // pred_fallthru
        _
      %p137 = scmp.le.s32.totalorder 1, %s15
      %p138 = scmp.lt.s32.totalorder %s15, 3
      %p139 = pnand %p137, %p138
      %p140 = pneg %p139
      // Predicated region
      $region25: #{tpu_custom_call.1} parent=5 // pred_check
        _
      $region26: #{tpu_custom_call.1} parent=5 // pred_check_branch
        %142 = sbr.rel (%p139) target = $region28
      $region27: #{tpu_custom_call.1} parent=5 // pred_region
        %s143 = ssub.s32 %s15, 1
        // Predicated region
        $region29: #{tpu_custom_call.1} parent=27 // pred_check
          %p144 = pneg %p36
        $region30: #{tpu_custom_call.1} parent=27 // pred_check_branch
          %146 = sbr.rel (%p144) target = $region32
        $region31: #{tpu_custom_call.1} parent=27 // pred_region
          %147 = dma.done [#allocation5], 16
        $region32: #{tpu_custom_call.1} parent=27 // pred_fallthru
          _
        %s148 = sand.u32 %s49, 1
        %s149 = scalar_lea.sflag [#allocation3], %s148
        %s150 = sand.u32 %s49, 1
        %s151 = smul.addr %s150, 64
        %s152 = scalar_lea.vmem [#allocation6], %s151
        // Predicated region
        $region33: #{tpu_custom_call.1} parent=27 // pred_check
          %p153 = pneg %p62
        $region34: #{tpu_custom_call.1} parent=27 // pred_check_branch
          %155 = sbr.rel (%p153) target = $region36
        $region35: #{tpu_custom_call.1} parent=27 // pred_region
          %156 = dma.done %s149, 1024
        $region36: #{tpu_custom_call.1} parent=27 // pred_fallthru
          _
        %157 = sfence
        %p158 = pneg %p36
        %p159 = pneg %p33
        %s160 = sand.u32 %s49, 1
        %s161 = scalar_lea.sflag [#allocation3], %s160
        %s162 = sand.u32 %s49, 1
        %s163 = smul.addr %s162, 64
        %s164 = scalar_lea.vmem [#allocation6], %s163
        %p165 = pneg %p62
        %p166 = pneg %p59
        %p167 = pneg %p88
        %p168 = pneg %p85
        %s169 = sand.u32 %s75, 1
        %s170 = scalar_lea.sflag [#allocation4], %s169
        %s171 = sand.u32 %s75, 1
        %s172 = smul.addr %s171, 64
        %s173 = scalar_lea.vmem [#allocation7], %s172
        %v174 = vld [vmem:[%s152] sm:$0xff]
        %v175 = vld [vmem:[%s152 + $0x8] sm:$0xff]
        %s176 = scalar_lea.vmem %s152, 16 [#allocation6]
        %v177 = vld [vmem:[%s176] sm:$0xff]
        %v178 = vld [vmem:[%s176 + $0x8] sm:$0xff]
        %s179 = scalar_lea.vmem %s152, 32 [#allocation6]
        %v180 = vld [vmem:[%s179] sm:$0xff]
        %v181 = vld [vmem:[%s179 + $0x8] sm:$0xff]
        %s182 = scalar_lea.vmem %s152, 48 [#allocation6]
        %v183 = vld [vmem:[%s182] sm:$0xff]
        %v184 = vld [vmem:[%s182 + $0x8] sm:$0xff]
        %s185 = sld [smem:[#allocation2]]
        %v186 = vstv %s185
        %v187 = vmul.f32 %v186, %v174
        %v188 = vmul.f32 %v186, %v175
        %s189 = sld [smem:[#allocation2 + $0x1]]
        %v190 = vstv %s189
        %v191 = vmul.f32 %v190, %v177
        %v192 = vmul.f32 %v190, %v178
        %v193 = vadd.f32 %v187, %v191
        %v194 = vadd.f32 %v188, %v192
        %s195 = sld [smem:[#allocation2 + $0x2]]
        %v196 = vstv %s195
        %v197 = vmul.f32 %v196, %v180
        %v198 = vmul.f32 %v196, %v181
        %v199 = vadd.f32 %v193, %v197
        %v200 = vadd.f32 %v194, %v198
        %s201 = sld [smem:[#allocation2 + $0x3]]
        %v202 = vstv %s201
        %v203 = vmul.f32 %v202, %v183
        %v204 = vmul.f32 %v202, %v184
        %v205 = vadd.f32 %v199, %v203
        %v206 = vadd.f32 %v200, %v204
        %s207 = sld [smem:[#allocation2 + $0x4]]
        %v208 = vstv %s207
        %v209 = vmul.f32 %v208, %v174
        %v210 = vmul.f32 %v208, %v175
        %s211 = sld [smem:[#allocation2 + $0x5]]
        %v212 = vstv %s211
        %v213 = vmul.f32 %v212, %v177
        %v214 = vmul.f32 %v212, %v178
        %v215 = vadd.f32 %v209, %v213
        %v216 = vadd.f32 %v210, %v214
        %s217 = sld [smem:[#allocation2 + $0x6]]
        %v218 = vstv %s217
        %v219 = vmul.f32 %v218, %v180
        %v220 = vmul.f32 %v218, %v181
        %v221 = vadd.f32 %v215, %v219
        %v222 = vadd.f32 %v216, %v220
        %s223 = sld [smem:[#allocation2 + $0x7]]
        %v224 = vstv %s223
        %v225 = vmul.f32 %v224, %v183
        %v226 = vmul.f32 %v224, %v184
        %v227 = vadd.f32 %v221, %v225
        %v228 = vadd.f32 %v222, %v226
        %s229 = sld [smem:[#allocation2 + $0x8]]
        %v230 = vstv %s229
        %v231 = vmul.f32 %v230, %v174
        %v232 = vmul.f32 %v230, %v175
        %s233 = sld [smem:[#allocation2 + $0x9]]
        %v234 = vstv %s233
        %v235 = vmul.f32 %v234, %v177
        %v236 = vmul.f32 %v234, %v178
        %v237 = vadd.f32 %v231, %v235
        %v238 = vadd.f32 %v232, %v236
        %s239 = sld [smem:[#allocation2 + $0xa]]
        %v240 = vstv %s239
        %v241 = vmul.f32 %v240, %v180
        %v242 = vmul.f32 %v240, %v181
        %v243 = vadd.f32 %v237, %v241
        %v244 = vadd.f32 %v238, %v242
        %s245 = sld [smem:[#allocation2 + $0xb]]
        %v246 = vstv %s245
        %v247 = vmul.f32 %v246, %v183
        %v248 = vmul.f32 %v246, %v184
        %v249 = vadd.f32 %v243, %v247
        %v250 = vadd.f32 %v244, %v248
        %s251 = sld [smem:[#allocation2 + $0xc]]
        %v252 = vstv %s251
        %v253 = vmul.f32 %v252, %v174
        %v254 = vmul.f32 %v252, %v175
        %s255 = sld [smem:[#allocation2 + $0xd]]
        %v256 = vstv %s255
        %v257 = vmul.f32 %v256, %v177
        %v258 = vmul.f32 %v256, %v178
        %v259 = vadd.f32 %v253, %v257
        %v260 = vadd.f32 %v254, %v258
        %s261 = sld [smem:[#allocation2 + $0xe]]
        %v262 = vstv %s261
        %v263 = vmul.f32 %v262, %v180
        %v264 = vmul.f32 %v262, %v181
        %v265 = vadd.f32 %v259, %v263
        %v266 = vadd.f32 %v260, %v264
        %s267 = sld [smem:[#allocation2 + $0xf]]
        %v268 = vstv %s267
        %v269 = vmul.f32 %v268, %v183
        %v270 = vmul.f32 %v268, %v184
        %v271 = vadd.f32 %v265, %v269
        %v272 = vadd.f32 %v266, %v270
        %v273 = vtanh.pop %v205
        %v274 = vtanh.pop %v206
        %v275 = vtanh.pop %v227
        %v276 = vtanh.pop %v228
        %v277 = vtanh.pop %v249
        %v278 = vtanh.pop %v250
        %v279 = vtanh.pop %v271
        %v280 = vtanh.pop %v272
        %vm281 = vcmask 130048
        %282 = vst.msk [vmem:[%s173] sm:$0xff] %vm281, %v273
        %283 = vst.msk [vmem:[%s173 + $0x8] sm:$0xff] %vm281, %v274
        %284 = vst.msk [vmem:[%s173 + $0x10] sm:$0xff] %vm281, %v275
        %285 = vst.msk [vmem:[%s173 + $0x18] sm:$0xff] %vm281, %v276
        %286 = vst.msk [vmem:[%s173 + $0x20] sm:$0xff] %vm281, %v277
        %287 = vst.msk [vmem:[%s173 + $0x28] sm:$0xff] %vm281, %v278
        %288 = vst.msk [vmem:[%s173 + $0x30] sm:$0xff] %vm281, %v279
        %289 = vst.msk [vmem:[%s173 + $0x38] sm:$0xff] %vm281, %v280
        %s290 = sld [smem:[#allocation2 + $0x10]]
        %v291 = vstv %s290
        %v292 = vmul.f32 %v291, %v174
        %v293 = vmul.f32 %v291, %v175
        %s294 = sld [smem:[#allocation2 + $0x11]]
        %v295 = vstv %s294
        %v296 = vmul.f32 %v295, %v177
        %v297 = vmul.f32 %v295, %v178
        %v298 = vadd.f32 %v292, %v296
        %v299 = vadd.f32 %v293, %v297
        %s300 = sld [smem:[#allocation2 + $0x12]]
        %v301 = vstv %s300
        %v302 = vmul.f32 %v301, %v180
        %v303 = vmul.f32 %v301, %v181
        %v304 = vadd.f32 %v298, %v302
        %v305 = vadd.f32 %v299, %v303
        %s306 = sld [smem:[#allocation2 + $0x13]]
        %v307 = vstv %s306
        %v308 = vmul.f32 %v307, %v183
        %v309 = vmul.f32 %v307, %v184
        %v310 = vadd.f32 %v304, %v308
        %v311 = vadd.f32 %v305, %v309
        %s312 = sld [smem:[#allocation2 + $0x14]]
        %v313 = vstv %s312
        %v314 = vmul.f32 %v313, %v174
        %v315 = vmul.f32 %v313, %v175
        %s316 = sld [smem:[#allocation2 + $0x15]]
        %v317 = vstv %s316
        %v318 = vmul.f32 %v317, %v177
        %v319 = vmul.f32 %v317, %v178
        %v320 = vadd.f32 %v314, %v318
        %v321 = vadd.f32 %v315, %v319
        %s322 = sld [smem:[#allocation2 + $0x16]]
        %v323 = vstv %s322
        %v324 = vmul.f32 %v323, %v180
        %v325 = vmul.f32 %v323, %v181
        %v326 = vadd.f32 %v320, %v324
        %v327 = vadd.f32 %v321, %v325
        %s328 = sld [smem:[#allocation2 + $0x17]]
        %v329 = vstv %s328
        %v330 = vmul.f32 %v329, %v183
        %v331 = vmul.f32 %v329, %v184
        %v332 = vadd.f32 %v326, %v330
        %v333 = vadd.f32 %v327, %v331
        %s334 = sld [smem:[#allocation2 + $0x18]]
        %v335 = vstv %s334
        %v336 = vmul.f32 %v335, %v174
        %v337 = vmul.f32 %v335, %v175
        %s338 = sld [smem:[#allocation2 + $0x19]]
        %v339 = vstv %s338
        %v340 = vmul.f32 %v339, %v177
        %v341 = vmul.f32 %v339, %v178
        %v342 = vadd.f32 %v336, %v340
        %v343 = vadd.f32 %v337, %v341
        %s344 = sld [smem:[#allocation2 + $0x1a]]
        %v345 = vstv %s344
        %v346 = vmul.f32 %v345, %v180
        %v347 = vmul.f32 %v345, %v181
        %v348 = vadd.f32 %v342, %v346
        %v349 = vadd.f32 %v343, %v347
        %s350 = sld [smem:[#allocation2 + $0x1b]]
        %v351 = vstv %s350
        %v352 = vmul.f32 %v351, %v183
        %v353 = vmul.f32 %v351, %v184
        %v354 = vadd.f32 %v348, %v352
        %v355 = vadd.f32 %v349, %v353
        %s356 = sld [smem:[#allocation2 + $0x1c]]
        %v357 = vstv %s356
        %v358 = vmul.f32 %v357, %v174
        %v359 = vmul.f32 %v357, %v175
        %s360 = sld [smem:[#allocation2 + $0x1d]]
        %v361 = vstv %s360
        %v362 = vmul.f32 %v361, %v177
        %v363 = vmul.f32 %v361, %v178
        %v364 = vadd.f32 %v358, %v362
        %v365 = vadd.f32 %v359, %v363
        %s366 = sld [smem:[#allocation2 + $0x1e]]
        %v367 = vstv %s366
        %v368 = vmul.f32 %v367, %v180
        %v369 = vmul.f32 %v367, %v181
        %v370 = vadd.f32 %v364, %v368
        %v371 = vadd.f32 %v365, %v369
        %s372 = sld [smem:[#allocation2 + $0x1f]]
        %v373 = vstv %s372
        %v374 = vmul.f32 %v373, %v183
        %v375 = vmul.f32 %v373, %v184
        %v376 = vadd.f32 %v370, %v374
        %v377 = vadd.f32 %v371, %v375
        %v378 = vtanh.pop %v310
        %v379 = vtanh.pop %v311
        %v380 = vtanh.pop %v332
        %v381 = vtanh.pop %v333
        %v382 = vtanh.pop %v354
        %v383 = vtanh.pop %v355
        %v384 = vtanh.pop %v376
        %v385 = vtanh.pop %v377
        %394 = vrot.lane.b32.xlu0 %v378, 16
        %v395 = vpop.permute.xlu0 %394
        %396 = vrot.lane.b32.xlu0 %v379, 16
        %v397 = vpop.permute.xlu0 %396
        %398 = vrot.lane.b32.xlu0 %v380, 16
        %v399 = vpop.permute.xlu0 %398
        %400 = vrot.lane.b32.xlu0 %v381, 16
        %v401 = vpop.permute.xlu0 %400
        %402 = vrot.lane.b32.xlu0 %v382, 16
        %v403 = vpop.permute.xlu0 %402
        %404 = vrot.lane.b32.xlu0 %v383, 16
        %v405 = vpop.permute.xlu0 %404
        %406 = vrot.lane.b32.xlu0 %v384, 16
        %v407 = vpop.permute.xlu0 %406
        %408 = vrot.lane.b32.xlu0 %v385, 16
        %v409 = vpop.permute.xlu0 %408
        %vm418 = vcmask 261248
        %419 = vst.msk [vmem:[%s173] sm:$0xff] %vm418, %v395
        %420 = vst.msk [vmem:[%s173 + $0x8] sm:$0xff] %vm418, %v397
        %421 = vst.msk [vmem:[%s173 + $0x10] sm:$0xff] %vm418, %v399
        %422 = vst.msk [vmem:[%s173 + $0x18] sm:$0xff] %vm418, %v401
        %423 = vst.msk [vmem:[%s173 + $0x20] sm:$0xff] %vm418, %v403
        %424 = vst.msk [vmem:[%s173 + $0x28] sm:$0xff] %vm418, %v405
        %425 = vst.msk [vmem:[%s173 + $0x30] sm:$0xff] %vm418, %v407
        %426 = vst.msk [vmem:[%s173 + $0x38] sm:$0xff] %vm418, %v409
        %s427 = sld [smem:[#allocation2 + $0x20]]
        %v428 = vstv %s427
        %v429 = vmul.f32 %v428, %v174
        %v430 = vmul.f32 %v428, %v175
        %s431 = sld [smem:[#allocation2 + $0x21]]
        %v432 = vstv %s431
        %v433 = vmul.f32 %v432, %v177
        %v434 = vmul.f32 %v432, %v178
        %v435 = vadd.f32 %v429, %v433
        %v436 = vadd.f32 %v430, %v434
        %s437 = sld [smem:[#allocation2 + $0x22]]
        %v438 = vstv %s437
        %v439 = vmul.f32 %v438, %v180
        %v440 = vmul.f32 %v438, %v181
        %v441 = vadd.f32 %v435, %v439
        %v442 = vadd.f32 %v436, %v440
        %s443 = sld [smem:[#allocation2 + $0x23]]
        %v444 = vstv %s443
        %v445 = vmul.f32 %v444, %v183
        %v446 = vmul.f32 %v444, %v184
        %v447 = vadd.f32 %v441, %v445
        %v448 = vadd.f32 %v442, %v446
        %s449 = sld [smem:[#allocation2 + $0x24]]
        %v450 = vstv %s449
        %v451 = vmul.f32 %v450, %v174
        %v452 = vmul.f32 %v450, %v175
        %s453 = sld [smem:[#allocation2 + $0x25]]
        %v454 = vstv %s453
        %v455 = vmul.f32 %v454, %v177
        %v456 = vmul.f32 %v454, %v178
        %v457 = vadd.f32 %v451, %v455
        %v458 = vadd.f32 %v452, %v456
        %s459 = sld [smem:[#allocation2 + $0x26]]
        %v460 = vstv %s459
        %v461 = vmul.f32 %v460, %v180
        %v462 = vmul.f32 %v460, %v181
        %v463 = vadd.f32 %v457, %v461
        %v464 = vadd.f32 %v458, %v462
        %s465 = sld [smem:[#allocation2 + $0x27]]
        %v466 = vstv %s465
        %v467 = vmul.f32 %v466, %v183
        %v468 = vmul.f32 %v466, %v184
        %v469 = vadd.f32 %v463, %v467
        %v470 = vadd.f32 %v464, %v468
        %s471 = sld [smem:[#allocation2 + $0x28]]
        %v472 = vstv %s471
        %v473 = vmul.f32 %v472, %v174
        %v474 = vmul.f32 %v472, %v175
        %s475 = sld [smem:[#allocation2 + $0x29]]
        %v476 = vstv %s475
        %v477 = vmul.f32 %v476, %v177
        %v478 = vmul.f32 %v476, %v178
        %v479 = vadd.f32 %v473, %v477
        %v480 = vadd.f32 %v474, %v478
        %s481 = sld [smem:[#allocation2 + $0x2a]]
        %v482 = vstv %s481
        %v483 = vmul.f32 %v482, %v180
        %v484 = vmul.f32 %v482, %v181
        %v485 = vadd.f32 %v479, %v483
        %v486 = vadd.f32 %v480, %v484
        %s487 = sld [smem:[#allocation2 + $0x2b]]
        %v488 = vstv %s487
        %v489 = vmul.f32 %v488, %v183
        %v490 = vmul.f32 %v488, %v184
        %v491 = vadd.f32 %v485, %v489
        %v492 = vadd.f32 %v486, %v490
        %s493 = sld [smem:[#allocation2 + $0x2c]]
        %v494 = vstv %s493
        %v495 = vmul.f32 %v494, %v174
        %v496 = vmul.f32 %v494, %v175
        %s497 = sld [smem:[#allocation2 + $0x2d]]
        %v498 = vstv %s497
        %v499 = vmul.f32 %v498, %v177
        %v500 = vmul.f32 %v498, %v178
        %v501 = vadd.f32 %v495, %v499
        %v502 = vadd.f32 %v496, %v500
        %s503 = sld [smem:[#allocation2 + $0x2e]]
        %v504 = vstv %s503
        %v505 = vmul.f32 %v504, %v180
        %v506 = vmul.f32 %v504, %v181
        %v507 = vadd.f32 %v501, %v505
        %v508 = vadd.f32 %v502, %v506
        %s509 = sld [smem:[#allocation2 + $0x2f]]
        %v510 = vstv %s509
        %v511 = vmul.f32 %v510, %v183
        %v512 = vmul.f32 %v510, %v184
        %v513 = vadd.f32 %v507, %v511
        %v514 = vadd.f32 %v508, %v512
        %v515 = vtanh.pop %v447
        %v516 = vtanh.pop %v448
        %v517 = vtanh.pop %v469
        %v518 = vtanh.pop %v470
        %v519 = vtanh.pop %v491
        %v520 = vtanh.pop %v492
        %v521 = vtanh.pop %v513
        %v522 = vtanh.pop %v514
        %531 = vrot.lane.b32.xlu0 %v515, 32
        %v532 = vpop.permute.xlu0 %531
        %533 = vrot.lane.b32.xlu0 %v516, 32
        %v534 = vpop.permute.xlu0 %533
        %535 = vrot.lane.b32.xlu0 %v517, 32
        %v536 = vpop.permute.xlu0 %535
        %537 = vrot.lane.b32.xlu0 %v518, 32
        %v538 = vpop.permute.xlu0 %537
        %539 = vrot.lane.b32.xlu0 %v519, 32
        %v540 = vpop.permute.xlu0 %539
        %541 = vrot.lane.b32.xlu0 %v520, 32
        %v542 = vpop.permute.xlu0 %541
        %543 = vrot.lane.b32.xlu0 %v521, 32
        %v544 = vpop.permute.xlu0 %543
        %545 = vrot.lane.b32.xlu0 %v522, 32
        %v546 = vpop.permute.xlu0 %545
        %vm555 = vcmask 392448
        %556 = vst.msk [vmem:[%s173] sm:$0xff] %vm555, %v532
        %557 = vst.msk [vmem:[%s173 + $0x8] sm:$0xff] %vm555, %v534
        %558 = vst.msk [vmem:[%s173 + $0x10] sm:$0xff] %vm555, %v536
        %559 = vst.msk [vmem:[%s173 + $0x18] sm:$0xff] %vm555, %v538
        %560 = vst.msk [vmem:[%s173 + $0x20] sm:$0xff] %vm555, %v540
        %561 = vst.msk [vmem:[%s173 + $0x28] sm:$0xff] %vm555, %v542
        %562 = vst.msk [vmem:[%s173 + $0x30] sm:$0xff] %vm555, %v544
        %563 = vst.msk [vmem:[%s173 + $0x38] sm:$0xff] %vm555, %v546
        %s564 = sand.u32 %s75, 1
        %s565 = scalar_lea.sflag [#allocation4], %s564
        %s566 = sand.u32 %s75, 1
        %s567 = smul.addr %s566, 64
        %s568 = scalar_lea.vmem [#allocation7], %s567
        // Predicated region
        $region37: #{tpu_custom_call.1} parent=27 // pred_check
          %p569 = pneg %p85
        $region38: #{tpu_custom_call.1} parent=27 // pred_check_branch
          %571 = sbr.rel (%p569) target = $region40
        $region39: #{tpu_custom_call.1} parent=27 // pred_region
          %s573 = ssub.s32 1024, 1024
          %574 = vsyncadd %s565, %s573
          %s575 = smul.addr %s20, 8
          %s576 = smul.addr %s575, 128
          %s577 = scalar_lea.hbm %s2, %s576
          %s578 = sshll.u32 %s568, 4
          %s579 = int_to_ptr.vmem [resolvable:$true] %s578
          %584 = dma.vmem_to_hbm [thread:$0]  %s579, 1024, %s577, %s565, 128, 128, 8
        $region40: #{tpu_custom_call.1} parent=27 // pred_fallthru
          _
      $region28: #{tpu_custom_call.1} parent=5 // pred_fallthru
        _
      %p585 = scmp.le.s32.totalorder 2, %s15
      // Predicated region
      $region41: #{tpu_custom_call.1} parent=5 // pred_check
        %p586 = pneg %p585
      $region42: #{tpu_custom_call.1} parent=5 // pred_check_branch
        %588 = sbr.rel (%p586) target = $region44
      $region43: #{tpu_custom_call.1} parent=5 // pred_region
        %s589 = ssub.s32 %s15, 2
        // Predicated region
        $region45: #{tpu_custom_call.1} parent=43 // pred_check
          %p590 = pneg %p91
        $region46: #{tpu_custom_call.1} parent=43 // pred_check_branch
          %592 = sbr.rel (%p590) target = $region48
        $region47: #{tpu_custom_call.1} parent=43 // pred_region
          %s593 = sand.u32 %s76, 1
          %s594 = scalar_lea.sflag [#allocation4], %s593
          %s595 = sand.u32 %s76, 1
          %s596 = smul.addr %s595, 64
          %s597 = scalar_lea.vmem [#allocation7], %s596
          %598 = dma.done %s594, 1024
        $region48: #{tpu_custom_call.1} parent=43 // pred_fallthru
          _
      $region44: #{tpu_custom_call.1} parent=5 // pred_fallthru
        _
    $region6: #{tpu_custom_call.1} parent=1 // loop_footer
      %s19 = sadd.s32 1, %s15
    $region7: #{tpu_custom_call.1} parent=1 // loop_footer_branch
      %14 = sbr.rel target = $region3
    $region8: #{tpu_custom_call.1} parent=1 // loop_exit
      _
    %599 = vsyncpa [#allocation3], 1
    %s600 = scalar_lea.sflag [#allocation3], 1
    %601 = vsyncpa %s600, 1
    %602 = vsyncpa [#allocation4], 1
    %s603 = scalar_lea.sflag [#allocation4], 1
    %604 = vsyncpa %s603, 1
    %605 = vsyncpa [#allocation5], 1
    %s606 = scalar_lea.sflag [#allocation5], 1
    %607 = vsyncpa %s606, 1

</llo_original>
